<compile_context>
chip_gen: v7x
topology: tpu7x:2x2x1
jax: 0.10.0
libtpu: 0.0.40
codegen_flags: <defaults>
</compile_context>

<pallas_src>
import math

import jax
import jax.numpy as jnp
from jax.experimental import pallas as pl
from jax.experimental.pallas import tpu as pltpu

_LANES = 128


def _round_up(v: int, m: int) -> int:
    return ((v + m - 1) // m) * m


def _tensorcores_per_chip() -> int:
    """Best-effort TensorCores-per-chip (v7x=2, v5e/v6e=1). Safe fallback: 1."""
    try:
        info = pltpu.get_tpu_info()
        for name in ("num_cores", "num_tensorcores", "tensorcores_per_chip",
                     "core_count"):
            v = getattr(info, name, None)
            if isinstance(v, int) and v > 0:
                return v
    except Exception:
        pass
    return 1


def make_bessel_basis(num_radial: int, cutoff: float = 5.0,
                      envelope_exponent: int = 5, max_tile_e: int = 65536,
                      out_dtype=jnp.float32, harmonic_freq: bool = True,
                      radial_major_output: bool = False):
    """Returns (forward_fn, freq_init) reproducing BesselBasisLayer.forward.

    harmonic_freq=True assumes freq[k] == (k+1) * freq[0] (the k*pi init);
    set False if freq has been trained to arbitrary values.
    radial_major_output=True returns the (num_radial, E) layout directly
    (no wrapper transpose), for consumers that contract the leading axis.
    """
    # Envelope constants (Envelope.__init__)
    p = envelope_exponent + 1
    a = -(p + 1) * (p + 2) / 2.0
    b = float(p * (p + 2))
    c = -p * (p + 1) / 2.0
    inv_cutoff = 1.0 / float(cutoff)

    # Parameter init (reset_parameters): freq = [1, 2, ..., num_radial] * pi
    freq_init = jnp.arange(1, num_radial + 1, dtype=jnp.float32) * math.pi

    out_bytes = jnp.dtype(out_dtype).itemsize

    def _choose_tile(e: int) -> int:
        # Cap so double-buffered pipelined VMEM (2x output block + 2x dist
        # block) stays <= ~16 MiB: safe under v7x's 32 MiB scoped / 64 MiB
        # physical VMEM as well as v5e/v6e defaults.
        budget = 16 * 1024 * 1024
        per_lane = 2 * (num_radial * out_bytes + 4)
        t_cap = max(_LANES, (budget // per_lane) // _LANES * _LANES)
        t_max = min(max_tile_e, t_cap)
        if e <= t_max:
            # Whole problem fits in one block.  Only split for >=2 grid steps
            # on chips with >=2 TensorCores (v7x), where ("parallel",) shards.
            if _tensorcores_per_chip() >= 2 and e >= 2 * _LANES:
                return min(t_max, _round_up(pl.cdiv(e, 2), _LANES))
            return e  # block == full array: no ragged edge, no step overhead
        return t_max

    def forward(dist: jax.Array, freq: jax.Array) -> jax.Array:
        assert dist.ndim == 1
        e = dist.shape[0]
        t = _choose_tile(e)
        grid = (pl.cdiv(e, t),)

        def kernel(dist_ref, freq_ref, out_ref):
            # dist_ref: (1, t)  E lane-dense;  freq_ref: (num_radial, 1)
            # out_ref : (num_radial, t)  num_radial on sublanes, E on lanes
            x = dist_ref[...] * inv_cutoff                         # (1, t)

            # Ragged last block: lanes >= E hold unspecified values. Clamp to
            # x = 1 with a select (never a multiply) so garbage cannot leak.
            lane = jax.lax.broadcasted_iota(jnp.int32, x.shape, 1)
            in_bounds = (pl.program_id(0) * t + lane) < e
            x = jnp.where(in_bounds, x, 1.0)

            # Envelope: explicit multiply chain for x^(p-1) (no pow lowering
            # risk), approx reciprocal on the EUP + one Newton refinement.
            xp0 = x
            for _ in range(p - 2):
                xp0 = xp0 * x                                      # x^(p-1)
            xp1 = xp0 * x                                          # x^p
            xp2 = xp1 * x                                          # x^(p+1)
            r = pl.reciprocal(x, approx=True)
            r = r * (2.0 - x * r)                                  # ~1e-7 rel
            env = r + a * xp0 + b * xp1 + c * xp2
            env = jnp.where(in_bounds & (x < 1.0), env, 0.0)       # (1, t)

            if harmonic_freq:
                # sin(k*theta) via the stable rotation recurrence:
                #   alpha = 2 sin^2(theta/2), beta = sin(theta)
                #   s_{k+1} = s_k - (alpha*s_k - beta*c_k)
                #   c_{k+1} = c_k - (alpha*c_k + beta*s_k)
                f1 = freq_ref[0:1, :]                              # (1, 1)
                half = 0.5 * (f1 * x)                              # theta/2
                sh = jnp.sin(half)
                ch = jnp.cos(half)
                beta = 2.0 * sh * ch                               # sin(theta)
                alpha = 2.0 * sh * sh                              # 1-cos(theta)
                s = beta                                           # sin(1*theta)
                cc = 1.0 - alpha                                   # cos(1*theta)
                rows = [env * s]
                for _ in range(num_radial - 1):
                    s_next = s - (alpha * s - beta * cc)
                    cc = cc - (alpha * cc + beta * s)
                    s = s_next
                    rows.append(env * s)
                out = jnp.concatenate(rows, axis=0)                # (R, t)
            else:
                # General (trained) freq: full broadcast sin.
                out = env * jnp.sin(freq_ref[...] * x)             # (R, t)

            out_ref[...] = out.astype(out_ref.dtype)

        out_t = pl.pallas_call(
            kernel,
            out_shape=jax.ShapeDtypeStruct((num_radial, e), out_dtype),
            grid_spec=pltpu.PrefetchScalarGridSpec(
                num_scalar_prefetch=0,
                grid=grid,
                in_specs=[
                    pl.BlockSpec((1, t), lambda i: (0, i)),
                    pl.BlockSpec((num_radial, 1), lambda i: (0, 0)),
                ],
                out_specs=pl.BlockSpec((num_radial, t), lambda i: (0, i)),
            ),
            compiler_params=pltpu.CompilerParams(
                dimension_semantics=("parallel",)),
        )(dist.astype(jnp.float32).reshape(1, e),
          freq.astype(jnp.float32).reshape(num_radial, 1))

        if radial_major_output:
            return out_t                       # (num_radial, E), lane-dense
        # PyTorch layout; costs an XLA transpose (second HBM pass) -- prefer
        # radial_major_output=True when the consumer can contract axis 0.
        return out_t.T

    return forward, freq_init


def _reference(dist, freq, cutoff=5.0, envelope_exponent=5):
    p = envelope_exponent + 1
    a = -(p + 1) * (p + 2) / 2.0
    b = p * (p + 2) * 1.0
    c = -p * (p + 1) / 2.0
    x = dist[:, None] / cutoff
    x0 = x ** (p - 1)
    x1 = x0 * x
    x2 = x1 * x
    env = (1.0 / x + a * x0 + b * x1 + c * x2) * (x < 1.0).astype(x.dtype)
    return env * jnp.sin(freq[None, :] * x)


if __name__ == "__main__":
    num_radial = 8
    cutoff = 5.0
    envelope_exponent = 5

    key = jax.random.PRNGKey(0)
    # Edge distances, strictly positive (dist > 0 precondition), some > cutoff.
    dist = jax.random.uniform(key, (200,), jnp.float32, minval=0.1, maxval=7.0)

    forward, freq = make_bessel_basis(num_radial, cutoff, envelope_exponent)
    out = jax.block_until_ready(forward(dist, freq))
    ref = _reference(dist, freq, cutoff, envelope_exponent)
    assert out.shape == (200, num_radial), out.shape
    assert bool(jnp.all(jnp.isfinite(out))), "non-finite values in output"
    assert jnp.allclose(out, ref, atol=2e-5, rtol=2e-5), \
        float(jnp.max(jnp.abs(out - ref)))

    # Multi-tile path with a ragged last block (tile cap forced small).
    fwd2, freq2 = make_bessel_basis(num_radial, cutoff, envelope_exponent,
                                    max_tile_e=256)
    dist2 = jax.random.uniform(jax.random.PRNGKey(1), (700,), jnp.float32,
                               minval=0.1, maxval=7.0)
    out2 = jax.block_until_ready(fwd2(dist2, freq2))
    ref2 = _reference(dist2, freq2, cutoff, envelope_exponent)
    assert out2.shape == (700, num_radial)
    assert jnp.allclose(out2, ref2, atol=2e-5, rtol=2e-5), \
        float(jnp.max(jnp.abs(out2 - ref2)))

    # Radial-major (no wrapper transpose) variant for fused consumers.
    fwd3, _ = make_bessel_basis(num_radial, cutoff, envelope_exponent,
                                radial_major_output=True)
    out3 = jax.block_until_ready(fwd3(dist, freq))
    assert out3.shape == (num_radial, 200)
    assert jnp.allclose(out3, ref.T, atol=2e-5, rtol=2e-5)

    print("KERNEL_OK")
</pallas_src>

<mosaic_0001>
module attributes {stable_mosaic.version = 11 : i64} {
  func.func @kernel(%arg0: i32, %arg1: memref<1x200xf32, #tpu.memory_space<vmem>>, %arg2: memref<8x1xf32, #tpu.memory_space<vmem>>, %arg3: memref<8x200xf32, #tpu.memory_space<vmem>>) attributes {dimension_semantics = [#tpu.dimension_semantics<parallel>], iteration_bounds = array<i64: 1>, scalar_prefetch = 0 : i64, scratch_operands = 0 : i64, tpu.core_type = #tpu.core_type<tc>, window_params = [{transform_indices = @transform_0, window_bounds = array<i64: 1, 200>}, {pipeline_mode = #tpu.pipeline_mode<synchronous>, transform_indices = @transform_1, window_bounds = array<i64: 8, 1>}, {transform_indices = @transform_2, window_bounds = array<i64: 8, 200>}]} {
    %c0 = arith.constant 0 : index
    %c0_0 = arith.constant 0 : index
    %0 = vector.load %arg1[%c0, %c0_0] : memref<1x200xf32, #tpu.memory_space<vmem>>, vector<1x200xf32>
    %cst = arith.constant 2.000000e-01 : f32
    %1 = vector.broadcast %cst : f32 to vector<1x200xf32>
    %2 = arith.mulf %0, %1 : vector<1x200xf32>
    %3 = tpu.iota {dimensions = array<i32: 1>} : vector<1x200xi32>
    %c200_i32 = arith.constant 200 : i32
    %4 = arith.muli %arg0, %c200_i32 : i32
    %5 = vector.broadcast %4 : i32 to vector<1x200xi32>
    %6 = arith.addi %5, %3 : vector<1x200xi32>
    %c200_i32_1 = arith.constant 200 : i32
    %7 = vector.broadcast %c200_i32_1 : i32 to vector<1x200xi32>
    %8 = arith.cmpi slt, %6, %7 : vector<1x200xi32>
    %cst_2 = arith.constant 1.000000e+00 : f32
    %9 = vector.broadcast %cst_2 : f32 to vector<1x200xf32>
    %10 = arith.select %8, %2, %9 : vector<1x200xi1>, vector<1x200xf32>
    %11 = arith.mulf %10, %10 : vector<1x200xf32>
    %12 = arith.mulf %11, %10 : vector<1x200xf32>
    %13 = arith.mulf %12, %10 : vector<1x200xf32>
    %14 = arith.mulf %13, %10 : vector<1x200xf32>
    %15 = arith.mulf %14, %10 : vector<1x200xf32>
    %16 = arith.mulf %15, %10 : vector<1x200xf32>
    %17 = tpu.reciprocal %10 {approx = true} : vector<1x200xf32> -> vector<1x200xf32>
    %18 = arith.mulf %10, %17 : vector<1x200xf32>
    %cst_3 = arith.constant 2.000000e+00 : f32
    %19 = vector.broadcast %cst_3 : f32 to vector<1x200xf32>
    %20 = arith.subf %19, %18 : vector<1x200xf32>
    %21 = arith.mulf %17, %20 : vector<1x200xf32>
    %cst_4 = arith.constant -2.800000e+01 : f32
    %22 = vector.broadcast %cst_4 : f32 to vector<1x200xf32>
    %23 = arith.mulf %22, %14 : vector<1x200xf32>
    %24 = arith.addf %21, %23 : vector<1x200xf32>
    %cst_5 = arith.constant 4.800000e+01 : f32
    %25 = vector.broadcast %cst_5 : f32 to vector<1x200xf32>
    %26 = arith.mulf %25, %15 : vector<1x200xf32>
    %27 = arith.addf %24, %26 : vector<1x200xf32>
    %cst_6 = arith.constant -2.100000e+01 : f32
    %28 = vector.broadcast %cst_6 : f32 to vector<1x200xf32>
    %29 = arith.mulf %28, %16 : vector<1x200xf32>
    %30 = arith.addf %27, %29 : vector<1x200xf32>
    %cst_7 = arith.constant 1.000000e+00 : f32
    %31 = vector.broadcast %cst_7 : f32 to vector<1x200xf32>
    %32 = arith.cmpf olt, %10, %31 : vector<1x200xf32>
    %33 = arith.andi %8, %32 : vector<1x200xi1>
    %cst_8 = arith.constant 0.000000e+00 : f32
    %34 = vector.broadcast %cst_8 : f32 to vector<1x200xf32>
    %35 = arith.select %33, %30, %34 : vector<1x200xi1>, vector<1x200xf32>
    %c0_9 = arith.constant 0 : index
    %c0_10 = arith.constant 0 : index
    %36 = vector.load %arg2[%c0_9, %c0_10] : memref<8x1xf32, #tpu.memory_space<vmem>>, vector<1x1xf32>
    %37 = vector.broadcast %36 : vector<1x1xf32> to vector<1x200xf32>
    %38 = arith.mulf %37, %10 : vector<1x200xf32>
    %cst_11 = arith.constant 5.000000e-01 : f32
    %39 = vector.broadcast %cst_11 : f32 to vector<1x200xf32>
    %40 = arith.mulf %39, %38 : vector<1x200xf32>
    %41 = math.sin %40 : vector<1x200xf32>
    %42 = math.cos %40 : vector<1x200xf32>
    %cst_12 = arith.constant 2.000000e+00 : f32
    %43 = vector.broadcast %cst_12 : f32 to vector<1x200xf32>
    %44 = arith.mulf %43, %41 : vector<1x200xf32>
    %45 = arith.mulf %44, %42 : vector<1x200xf32>
    %cst_13 = arith.constant 2.000000e+00 : f32
    %46 = vector.broadcast %cst_13 : f32 to vector<1x200xf32>
    %47 = arith.mulf %46, %41 : vector<1x200xf32>
    %48 = arith.mulf %47, %41 : vector<1x200xf32>
    %cst_14 = arith.constant 1.000000e+00 : f32
    %49 = vector.broadcast %cst_14 : f32 to vector<1x200xf32>
    %50 = arith.subf %49, %48 : vector<1x200xf32>
    %51 = arith.mulf %35, %45 : vector<1x200xf32>
    %52 = arith.mulf %48, %45 : vector<1x200xf32>
    %53 = arith.mulf %45, %50 : vector<1x200xf32>
    %54 = arith.subf %52, %53 : vector<1x200xf32>
    %55 = arith.subf %45, %54 : vector<1x200xf32>
    %56 = arith.mulf %48, %50 : vector<1x200xf32>
    %57 = arith.mulf %45, %45 : vector<1x200xf32>
    %58 = arith.addf %56, %57 : vector<1x200xf32>
    %59 = arith.subf %50, %58 : vector<1x200xf32>
    %60 = arith.mulf %35, %55 : vector<1x200xf32>
    %61 = arith.mulf %48, %55 : vector<1x200xf32>
    %62 = arith.mulf %45, %59 : vector<1x200xf32>
    %63 = arith.subf %61, %62 : vector<1x200xf32>
    %64 = arith.subf %55, %63 : vector<1x200xf32>
    %65 = arith.mulf %48, %59 : vector<1x200xf32>
    %66 = arith.mulf %45, %55 : vector<1x200xf32>
    %67 = arith.addf %65, %66 : vector<1x200xf32>
    %68 = arith.subf %59, %67 : vector<1x200xf32>
    %69 = arith.mulf %35, %64 : vector<1x200xf32>
    %70 = arith.mulf %48, %64 : vector<1x200xf32>
    %71 = arith.mulf %45, %68 : vector<1x200xf32>
    %72 = arith.subf %70, %71 : vector<1x200xf32>
    %73 = arith.subf %64, %72 : vector<1x200xf32>
    %74 = arith.mulf %48, %68 : vector<1x200xf32>
    %75 = arith.mulf %45, %64 : vector<1x200xf32>
    %76 = arith.addf %74, %75 : vector<1x200xf32>
    %77 = arith.subf %68, %76 : vector<1x200xf32>
    %78 = arith.mulf %35, %73 : vector<1x200xf32>
    %79 = arith.mulf %48, %73 : vector<1x200xf32>
    %80 = arith.mulf %45, %77 : vector<1x200xf32>
    %81 = arith.subf %79, %80 : vector<1x200xf32>
    %82 = arith.subf %73, %81 : vector<1x200xf32>
    %83 = arith.mulf %48, %77 : vector<1x200xf32>
    %84 = arith.mulf %45, %73 : vector<1x200xf32>
    %85 = arith.addf %83, %84 : vector<1x200xf32>
    %86 = arith.subf %77, %85 : vector<1x200xf32>
    %87 = arith.mulf %35, %82 : vector<1x200xf32>
    %88 = arith.mulf %48, %82 : vector<1x200xf32>
    %89 = arith.mulf %45, %86 : vector<1x200xf32>
    %90 = arith.subf %88, %89 : vector<1x200xf32>
    %91 = arith.subf %82, %90 : vector<1x200xf32>
    %92 = arith.mulf %48, %86 : vector<1x200xf32>
    %93 = arith.mulf %45, %82 : vector<1x200xf32>
    %94 = arith.addf %92, %93 : vector<1x200xf32>
    %95 = arith.subf %86, %94 : vector<1x200xf32>
    %96 = arith.mulf %35, %91 : vector<1x200xf32>
    %97 = arith.mulf %48, %91 : vector<1x200xf32>
    %98 = arith.mulf %45, %95 : vector<1x200xf32>
    %99 = arith.subf %97, %98 : vector<1x200xf32>
    %100 = arith.subf %91, %99 : vector<1x200xf32>
    %101 = arith.mulf %48, %95 : vector<1x200xf32>
    %102 = arith.mulf %45, %91 : vector<1x200xf32>
    %103 = arith.addf %101, %102 : vector<1x200xf32>
    %104 = arith.subf %95, %103 : vector<1x200xf32>
    %105 = arith.mulf %35, %100 : vector<1x200xf32>
    %106 = arith.mulf %48, %100 : vector<1x200xf32>
    %107 = arith.mulf %45, %104 : vector<1x200xf32>
    %108 = arith.subf %106, %107 : vector<1x200xf32>
    %109 = arith.subf %100, %108 : vector<1x200xf32>
    %110 = arith.mulf %35, %109 : vector<1x200xf32>
    %111 = tpu.concatenate %51, %60, %69, %78, %87, %96, %105, %110 in 0 : vector<1x200xf32>, vector<1x200xf32>, vector<1x200xf32>, vector<1x200xf32>, vector<1x200xf32>, vector<1x200xf32>, vector<1x200xf32>, vector<1x200xf32> -> vector<8x200xf32>
    %c0_15 = arith.constant 0 : index
    %c0_16 = arith.constant 0 : index
    %112 = vector.load %arg3[%c0_15, %c0_16] : memref<8x200xf32, #tpu.memory_space<vmem>>, vector<8x200xf32>
    tpu.vector_store %arg3[%c0_15, %c0_16], %111 {strides = array<i32>} : memref<8x200xf32, #tpu.memory_space<vmem>>, vector<8x200xf32>,
    return
  }
  func.func @transform_0(%arg0: i32) -> (i32, i32) {
    %c0_i32 = arith.constant 0 : i32
    %c0_i32_0 = arith.constant 0 : i32
    return %c0_i32, %arg0 : i32, i32
  }
  func.func @transform_1(%arg0: i32) -> (i32, i32) {
    %c0_i32 = arith.constant 0 : i32
    %c0_i32_0 = arith.constant 0 : i32
    %c0_i32_1 = arith.constant 0 : i32
    return %c0_i32, %c0_i32_0 : i32, i32
  }
  func.func @transform_2(%arg0: i32) -> (i32, i32) {
    %c0_i32 = arith.constant 0 : i32
    %c0_i32_0 = arith.constant 0 : i32
    return %c0_i32, %arg0 : i32, i32
  }
}

</mosaic_0001>

<llo_original>
// kernel: tpu_custom_call.1
$region0: #{tpu_custom_call.1}
  #allocation0 [shape = 'u32[]', space=smem, size = 0x4, offset = 0x4, fixed_abs, tag = 'smem constant byte address 0x4 - core index']
  #allocation1 [shape = 'u32[144,128]{1,0:T(1,128)}', space=vmem, size = 0x12000, scoped, tag = 'internal scratch']
  %s0 = inlined_call_operand.vmem [shape: f32[1,200], index: 0, kind: input, shape index: {}]
  %s1 = inlined_call_operand.vmem [shape: f32[8,1], index: 1, kind: input, shape index: {}]
  %s2 = inlined_call_operand.hbm [shape: f32[8,200], index: 2, kind: output, shape index: {}]
  %s3 = sld [smem:[#allocation0]]
  $region18: #{tpu_custom_call.1} parent=0
    _
  %s5 = ssub.s32 1, %s3
  %s6 = scalar_select 0, %s5, %s3
  $region1: #{tpu_custom_call.1} parent=0
    #allocation2 [shape = 'u8[8192]{0}', space=vmem, size = 0x2000, scoped, tag = 'output window, operand 0, single buffered']
    #allocation3 [shape = 's32[1]{0}', space=sflag, size = 0x4, scoped, tag = 'scoped memory for tpu_custom_call.1']
    %7 = vsyncpa [#allocation3], 0
    // Predicated region
    $region2: #{tpu_custom_call.1} parent=1 // pred_check
      _
    $region3: #{tpu_custom_call.1} parent=1 // pred_check_branch
      %9 = sbr.rel (0) target = $region5
    $region4: #{tpu_custom_call.1} parent=1 // pred_region
      _
    $region5: #{tpu_custom_call.1} parent=1 // pred_fallthru
      _
    // Predicated region
    $region6: #{tpu_custom_call.1} parent=1 // pred_check
      _
    $region7: #{tpu_custom_call.1} parent=1 // pred_check_branch
      %11 = sbr.rel (0) target = $region9
    $region8: #{tpu_custom_call.1} parent=1 // pred_region
      _
    $region9: #{tpu_custom_call.1} parent=1 // pred_fallthru
      _
    %v12 = vld [vmem:[%s0] sm:$0x3]
    %v13 = vmul.f32 %v12, 0.2
    %v14 = vlaneseq
    %v15 = vand.u32 %v14, 127
    %v16 = vadd.s32 %v15, 128
    %s17 = smul.u32 0, 200
    %v18 = vstv %s17
    %v19 = vadd.s32 %v18, %v15
    %v20 = vadd.s32 %v18, %v16
    %vm21 = vcmp.lt.s32.totalorder %v19, 200
    %vm22 = vcmp.lt.s32.totalorder %v20, 200
    %v24 = vlaneseq
    %v25 = vshrl.u32 %v24, 7
    %v26 = vsub.s32 0, %v25
    %v27 = vrot.slane %v13, %v26
    %v28 = vlaneseq
    %v29 = vshrl.u32 %v28, 7
    %v30 = vsub.s32 1, %v29
    %v31 = vrot.slane %v13, %v30
    %v34 = vsel %vm21, %v27, 1.0
    %v35 = vsel %vm22, %v31, 1.0
    %v36 = vmul.f32 %v34, %v34
    %v37 = vmul.f32 %v35, %v35
    %v38 = vmul.f32 %v36, %v34
    %v39 = vmul.f32 %v37, %v35
    %v40 = vmul.f32 %v38, %v34
    %v41 = vmul.f32 %v39, %v35
    %v42 = vmul.f32 %v40, %v34
    %v43 = vmul.f32 %v41, %v35
    %v44 = vmul.f32 %v42, %v34
    %v45 = vmul.f32 %v43, %v35
    %v46 = vmul.f32 %v44, %v34
    %v47 = vmul.f32 %v45, %v35
    %v48 = vrcp.pop %v34
    %v49 = vrcp.pop %v35
    %v50 = vmul.f32 %v34, %v48
    %v51 = vmul.f32 %v35, %v49
    %v52 = vsub.f32 2.0, %v50
    %v53 = vsub.f32 2.0, %v51
    %v54 = vmul.f32 %v48, %v52
    %v55 = vmul.f32 %v49, %v53
    %v56 = vmul.f32 %v42, -28.0
    %v57 = vmul.f32 %v43, -28.0
    %v58 = vadd.f32 %v54, %v56
    %v59 = vadd.f32 %v55, %v57
    %v60 = vmul.f32 %v44, 48.0
    %v61 = vmul.f32 %v45, 48.0
    %v62 = vadd.f32 %v58, %v60
    %v63 = vadd.f32 %v59, %v61
    %v64 = vmul.f32 %v46, -21.0
    %v65 = vmul.f32 %v47, -21.0
    %v66 = vadd.f32 %v62, %v64
    %v67 = vadd.f32 %v63, %v65
    %vm68 = vcmp.lt.f32.partialorder %v34, 1.0
    %vm69 = vcmp.lt.f32.partialorder %v35, 1.0
    %vm70 = vmand %vm21, %vm68
    %vm71 = vmand %vm22, %vm69
    %v72 = vsel %vm70, %v66, 0.0
    %v73 = vsel %vm71, %v67, 0.0
    %v74 = vld [vmem:[%s1] sm:$0x1]
    %76 = vset.pattern.permute.xlu0 0
    %77 = vperm.xlu0 %76, %v74
    %v78 = vpop.permute.xlu0 %77
    %v80 = vmul.f32 %v78, %v34
    %v81 = vmul.f32 %v78, %v35
    %v82 = vmul.f32 %v80, 0.5
    %v83 = vmul.f32 %v81, 0.5
    %v84 = vand.u32 2147483647, %v82
    %vm85 = vcmp.le.f32.partialorder %v84, 0.7853982
    %vm86 = vcmp.lt.s32.totalorder %v82, 0
    %v87 = vand.u32 %v82, 2139095040
    %v88 = vshrl.u32 %v87, 23
    %v89 = vsub.s32 %v88, 127
    %v90 = vand.u32 2147483647, %v82
    %v91 = vand.u32 %v90, 8388607
    %v92 = vor.u32 %v91, 8388608
    %v93 = vsub.s32 0, %v92
    %v94 = vadd.s32 %v89, 1
    %vm95 = vcmp.gt.s32.totalorder %v94, 0
    %v96 = vsel %vm95, %v94, 0
    %v97 = vshrl.u32 %v96, 5
    %v98 = vand.u32 %v96, 31
    %v99 = vsub.s32 32, %v98
    %v100 = vshrl.u32 683565275, %v99
    %v101 = vshll.u32 683565275, %v98
    %v102 = vshrl.u32 2475754826, %v99
    %v103 = vor.u32 %v101, %v102
    %v104 = vshll.u32 2475754826, %v98
    %v105 = vshrl.u32 2131351028, %v99
    %v106 = vor.u32 %v104, %v105
    %v107 = vshll.u32 2131351028, %v98
    %v108 = vshrl.u32 2102212464, %v99
    %v109 = vor.u32 %v107, %v108
    %v110 = vshll.u32 2102212464, %v98
    %v111 = vshrl.u32 920167782, %v99
    %v112 = vor.u32 %v110, %v111
    %v113 = vshll.u32 920167782, %v98
    %v114 = vshrl.u32 1326507024, %v99
    %v115 = vor.u32 %v113, %v114
    %vm116 = vcmp.lt.s32.totalorder %v97, 1
    %vm117 = vcmp.lt.s32.totalorder %v97, 2
    %vm118 = vcmp.lt.s32.totalorder %v97, 3
    %vm119 = vcmp.lt.s32.totalorder %v97, 4
    %v120 = vsel %vm116, %v100, %v103
    %v121 = vsel %vm119, %v109, 2102212464
    %v122 = vsel %vm118, %v106, %v121
    %v123 = vsel %vm117, %v120, %v122
    %v124 = vsel %vm116, %v103, %v106
    %v125 = vsel %vm119, %v112, 920167782
    %v126 = vsel %vm118, %v109, %v125
    %v127 = vsel %vm117, %v124, %v126
    %v128 = vsel %vm116, %v106, %v109
    %v129 = vsel %vm119, %v115, 1326507024
    %v130 = vsel %vm118, %v112, %v129
    %v131 = vsel %vm117, %v128, %v130
    %v132 = vshll.u32 %v92, 8
    %v133 = vmul.u32.u64.compose %v132, %v131
    %v134 = vextract.low.u32 %v133
    %v135 = vextract.high.u32 %v133
    %v136 = vmul.u32.u64.compose %v132, %v127
    %v137 = vextract.low.u32 %v136
    %v138 = vextract.high.u32 %v136
    %v139 = vmul.u32 %v132, %v123
    %v140 = vadd.s32 %v135, %v137
    %vm141 = vc.u32 %v135, %v137
    %v142 = vadd.s32 %v138, 1
    %v143 = vsel %vm141, %v142, %v138
    %v144 = vadd.s32 %v139, %v143
    %v145 = vadd.s32 %v144, 536870912
    %v146 = vshrl.u32 %v145, 30
    %v147 = vshll.u32 %v146, 30
    %v148 = vsub.s32 %v144, %v147
    %vm149 = vcmp.lt.s32.totalorder %v148, 0
    %v150 = vsub.s32 0, %v148
    %v151 = vsel %vm149, %v150, %v148
    %v152 = vclz %v151
    %v153 = vsub.s32 %v152, 2
    %vm154 = vcmp.gt.s32.totalorder 0, %v153
    %v155 = vsel %vm154, 0, %v153
    %v156 = vsub.s32 32, %v155
    %v157 = vshll.u32 %v148, %v155
    %v158 = vshrl.u32 %v140, %v156
    %v159 = vor.u32 %v157, %v158
    %v160 = vsub.s32 4294967266, %v155
    %v161 = vadd.s32 %v160, 127
    %v162 = vshll.u32 %v161, 23
    %v163 = vor.u32 4788187, %v162
    %v164 = vand.u32 2147483647, %v163
    %v166 = vcvt.s32.f32 %v159
    %v167 = vmul.f32 %v166, %v164
    %v168 = vxor.u32 %v167, 2147483648
    %v169 = vsel %vm86, %v168, %v167
    %v170 = vsub.s32 4, %v146
    %v171 = vsel %vm86, %v170, %v146
    %v172 = vsel %vm85, %v82, %v169
    %v173 = vsel %vm85, 0, %v171
    %v174 = vcosq.f32.pop %v172
    %v175 = vsinq.f32.pop %v172
    %vm176 = vweird.f32 %v82
    %v177 = vadd.s32 %v173, 3
    %v178 = vand.u32 %v177, 3
    %vm179 = vcmp.lt.s32.totalorder %v178, 2
    %vm180 = vcmp.eq.s32.totalorder %v178, 0
    %v181 = vxor.u32 %v175, 2147483648
    %v182 = vsel %vm180, %v174, %v181
    %vm183 = vcmp.eq.s32.totalorder %v178, 2
    %v184 = vxor.u32 %v174, 2147483648
    %v185 = vsel %vm183, %v184, %v175
    %v186 = vsel %vm179, %v182, %v185
    %v187 = vsel %vm176, nan, %v186
    %v188 = vand.u32 2147483647, %v83
    %vm189 = vcmp.le.f32.partialorder %v188, 0.7853982
    %vm190 = vcmp.lt.s32.totalorder %v83, 0
    %v191 = vand.u32 %v83, 2139095040
    %v192 = vshrl.u32 %v191, 23
    %v193 = vsub.s32 %v192, 127
    %v194 = vand.u32 2147483647, %v83
    %v195 = vand.u32 %v194, 8388607
    %v196 = vor.u32 %v195, 8388608
    %v197 = vsub.s32 0, %v196
    %v198 = vadd.s32 %v193, 1
    %vm199 = vcmp.gt.s32.totalorder %v198, 0
    %v200 = vsel %vm199, %v198, 0
    %v201 = vshrl.u32 %v200, 5
    %v202 = vand.u32 %v200, 31
    %v203 = vsub.s32 32, %v202
    %v204 = vshrl.u32 683565275, %v203
    %v205 = vshll.u32 683565275, %v202
    %v206 = vshrl.u32 2475754826, %v203
    %v207 = vor.u32 %v205, %v206
    %v208 = vshll.u32 2475754826, %v202
    %v209 = vshrl.u32 2131351028, %v203
    %v210 = vor.u32 %v208, %v209
    %v211 = vshll.u32 2131351028, %v202
    %v212 = vshrl.u32 2102212464, %v203
    %v213 = vor.u32 %v211, %v212
    %v214 = vshll.u32 2102212464, %v202
    %v215 = vshrl.u32 920167782, %v203
    %v216 = vor.u32 %v214, %v215
    %v217 = vshll.u32 920167782, %v202
    %v218 = vshrl.u32 1326507024, %v203
    %v219 = vor.u32 %v217, %v218
    %vm220 = vcmp.lt.s32.totalorder %v201, 1
    %vm221 = vcmp.lt.s32.totalorder %v201, 2
    %vm222 = vcmp.lt.s32.totalorder %v201, 3
    %vm223 = vcmp.lt.s32.totalorder %v201, 4
    %v224 = vsel %vm220, %v204, %v207
    %v225 = vsel %vm223, %v213, 2102212464
    %v226 = vsel %vm222, %v210, %v225
    %v227 = vsel %vm221, %v224, %v226
    %v228 = vsel %vm220, %v207, %v210
    %v229 = vsel %vm223, %v216, 920167782
    %v230 = vsel %vm222, %v213, %v229
    %v231 = vsel %vm221, %v228, %v230
    %v232 = vsel %vm220, %v210, %v213
    %v233 = vsel %vm223, %v219, 1326507024
    %v234 = vsel %vm222, %v216, %v233
    %v235 = vsel %vm221, %v232, %v234
    %v236 = vshll.u32 %v196, 8
    %v237 = vmul.u32.u64.compose %v236, %v235
    %v238 = vextract.low.u32 %v237
    %v239 = vextract.high.u32 %v237
    %v240 = vmul.u32.u64.compose %v236, %v231
    %v241 = vextract.low.u32 %v240
    %v242 = vextract.high.u32 %v240
    %v243 = vmul.u32 %v236, %v227
    %v244 = vadd.s32 %v239, %v241
    %vm245 = vc.u32 %v239, %v241
    %v246 = vadd.s32 %v242, 1
    %v247 = vsel %vm245, %v246, %v242
    %v248 = vadd.s32 %v243, %v247
    %v249 = vadd.s32 %v248, 536870912
    %v250 = vshrl.u32 %v249, 30
    %v251 = vshll.u32 %v250, 30
    %v252 = vsub.s32 %v248, %v251
    %vm253 = vcmp.lt.s32.totalorder %v252, 0
    %v254 = vsub.s32 0, %v252
    %v255 = vsel %vm253, %v254, %v252
    %v256 = vclz %v255
    %v257 = vsub.s32 %v256, 2
    %vm258 = vcmp.gt.s32.totalorder 0, %v257
    %v259 = vsel %vm258, 0, %v257
    %v260 = vsub.s32 32, %v259
    %v261 = vshll.u32 %v252, %v259
    %v262 = vshrl.u32 %v244, %v260
    %v263 = vor.u32 %v261, %v262
    %v264 = vsub.s32 4294967266, %v259
    %v265 = vadd.s32 %v264, 127
    %v266 = vshll.u32 %v265, 23
    %v267 = vor.u32 4788187, %v266
    %v268 = vand.u32 2147483647, %v267
    %v270 = vcvt.s32.f32 %v263
    %v271 = vmul.f32 %v270, %v268
    %v272 = vxor.u32 %v271, 2147483648
    %v273 = vsel %vm190, %v272, %v271
    %v274 = vsub.s32 4, %v250
    %v275 = vsel %vm190, %v274, %v250
    %v276 = vsel %vm189, %v83, %v273
    %v277 = vsel %vm189, 0, %v275
    %v278 = vcosq.f32.pop %v276
    %v279 = vsinq.f32.pop %v276
    %vm280 = vweird.f32 %v83
    %v281 = vadd.s32 %v277, 3
    %v282 = vand.u32 %v281, 3
    %vm283 = vcmp.lt.s32.totalorder %v282, 2
    %vm284 = vcmp.eq.s32.totalorder %v282, 0
    %v285 = vxor.u32 %v279, 2147483648
    %v286 = vsel %vm284, %v278, %v285
    %vm287 = vcmp.eq.s32.totalorder %v282, 2
    %v288 = vxor.u32 %v278, 2147483648
    %v289 = vsel %vm287, %v288, %v279
    %v290 = vsel %vm283, %v286, %v289
    %v291 = vsel %vm280, nan, %v290
    %v292 = vand.u32 2147483647, %v82
    %vm293 = vcmp.le.f32.partialorder %v292, 0.7853982
    %vm294 = vcmp.lt.s32.totalorder %v82, 0
    %v295 = vand.u32 %v82, 2139095040
    %v296 = vshrl.u32 %v295, 23
    %v297 = vsub.s32 %v296, 127
    %v298 = vand.u32 2147483647, %v82
    %v299 = vand.u32 %v298, 8388607
    %v300 = vor.u32 %v299, 8388608
    %v301 = vsub.s32 0, %v300
    %v302 = vadd.s32 %v297, 1
    %vm303 = vcmp.gt.s32.totalorder %v302, 0
    %v304 = vsel %vm303, %v302, 0
    %v305 = vshrl.u32 %v304, 5
    %v306 = vand.u32 %v304, 31
    %v307 = vsub.s32 32, %v306
    %v308 = vshrl.u32 683565275, %v307
    %v309 = vshll.u32 683565275, %v306
    %v310 = vshrl.u32 2475754826, %v307
    %v311 = vor.u32 %v309, %v310
    %v312 = vshll.u32 2475754826, %v306
    %v313 = vshrl.u32 2131351028, %v307
    %v314 = vor.u32 %v312, %v313
    %v315 = vshll.u32 2131351028, %v306
    %v316 = vshrl.u32 2102212464, %v307
    %v317 = vor.u32 %v315, %v316
    %v318 = vshll.u32 2102212464, %v306
    %v319 = vshrl.u32 920167782, %v307
    %v320 = vor.u32 %v318, %v319
    %v321 = vshll.u32 920167782, %v306
    %v322 = vshrl.u32 1326507024, %v307
    %v323 = vor.u32 %v321, %v322
    %vm324 = vcmp.lt.s32.totalorder %v305, 1
    %vm325 = vcmp.lt.s32.totalorder %v305, 2
    %vm326 = vcmp.lt.s32.totalorder %v305, 3
    %vm327 = vcmp.lt.s32.totalorder %v305, 4
    %v328 = vsel %vm324, %v308, %v311
    %v329 = vsel %vm327, %v317, 2102212464
    %v330 = vsel %vm326, %v314, %v329
    %v331 = vsel %vm325, %v328, %v330
    %v332 = vsel %vm324, %v311, %v314
    %v333 = vsel %vm327, %v320, 920167782
    %v334 = vsel %vm326, %v317, %v333
    %v335 = vsel %vm325, %v332, %v334
    %v336 = vsel %vm324, %v314, %v317
    %v337 = vsel %vm327, %v323, 1326507024
    %v338 = vsel %vm326, %v320, %v337
    %v339 = vsel %vm325, %v336, %v338
    %v340 = vshll.u32 %v300, 8
    %v341 = vmul.u32.u64.compose %v340, %v339
    %v342 = vextract.low.u32 %v341
    %v343 = vextract.high.u32 %v341
    %v344 = vmul.u32.u64.compose %v340, %v335
    %v345 = vextract.low.u32 %v344
    %v346 = vextract.high.u32 %v344
    %v347 = vmul.u32 %v340, %v331
    %v348 = vadd.s32 %v343, %v345
    %vm349 = vc.u32 %v343, %v345
    %v350 = vadd.s32 %v346, 1
    %v351 = vsel %vm349, %v350, %v346
    %v352 = vadd.s32 %v347, %v351
    %v353 = vadd.s32 %v352, 536870912
    %v354 = vshrl.u32 %v353, 30
    %v355 = vshll.u32 %v354, 30
    %v356 = vsub.s32 %v352, %v355
    %vm357 = vcmp.lt.s32.totalorder %v356, 0
    %v358 = vsub.s32 0, %v356
    %v359 = vsel %vm357, %v358, %v356
    %v360 = vclz %v359
    %v361 = vsub.s32 %v360, 2
    %vm362 = vcmp.gt.s32.totalorder 0, %v361
    %v363 = vsel %vm362, 0, %v361
    %v364 = vsub.s32 32, %v363
    %v365 = vshll.u32 %v356, %v363
    %v366 = vshrl.u32 %v348, %v364
    %v367 = vor.u32 %v365, %v366
    %v368 = vsub.s32 4294967266, %v363
    %v369 = vadd.s32 %v368, 127
    %v370 = vshll.u32 %v369, 23
    %v371 = vor.u32 4788187, %v370
    %v372 = vand.u32 2147483647, %v371
    %v374 = vcvt.s32.f32 %v367
    %v375 = vmul.f32 %v374, %v372
    %v376 = vxor.u32 %v375, 2147483648
    %v377 = vsel %vm294, %v376, %v375
    %v378 = vsub.s32 4, %v354
    %v379 = vsel %vm294, %v378, %v354
    %v380 = vsel %vm293, %v82, %v377
    %v381 = vsel %vm293, 0, %v379
    %v382 = vcosq.f32.pop %v380
    %v383 = vsinq.f32.pop %v380
    %vm384 = vweird.f32 %v82
    %v385 = vand.u32 %v381, 3
    %vm386 = vcmp.lt.s32.totalorder %v385, 2
    %vm387 = vcmp.eq.s32.totalorder %v385, 0
    %v388 = vxor.u32 %v383, 2147483648
    %v389 = vsel %vm387, %v382, %v388
    %vm390 = vcmp.eq.s32.totalorder %v385, 2
    %v391 = vxor.u32 %v382, 2147483648
    %v392 = vsel %vm390, %v391, %v383
    %v393 = vsel %vm386, %v389, %v392
    %v394 = vsel %vm384, nan, %v393
    %v395 = vand.u32 2147483647, %v83
    %vm396 = vcmp.le.f32.partialorder %v395, 0.7853982
    %vm397 = vcmp.lt.s32.totalorder %v83, 0
    %v398 = vand.u32 %v83, 2139095040
    %v399 = vshrl.u32 %v398, 23
    %v400 = vsub.s32 %v399, 127
    %v401 = vand.u32 2147483647, %v83
    %v402 = vand.u32 %v401, 8388607
    %v403 = vor.u32 %v402, 8388608
    %v404 = vsub.s32 0, %v403
    %v405 = vadd.s32 %v400, 1
    %vm406 = vcmp.gt.s32.totalorder %v405, 0
    %v407 = vsel %vm406, %v405, 0
    %v408 = vshrl.u32 %v407, 5
    %v409 = vand.u32 %v407, 31
    %v410 = vsub.s32 32, %v409
    %v411 = vshrl.u32 683565275, %v410
    %v412 = vshll.u32 683565275, %v409
    %v413 = vshrl.u32 2475754826, %v410
    %v414 = vor.u32 %v412, %v413
    %v415 = vshll.u32 2475754826, %v409
    %v416 = vshrl.u32 2131351028, %v410
    %v417 = vor.u32 %v415, %v416
    %v418 = vshll.u32 2131351028, %v409
    %v419 = vshrl.u32 2102212464, %v410
    %v420 = vor.u32 %v418, %v419
    %v421 = vshll.u32 2102212464, %v409
    %v422 = vshrl.u32 920167782, %v410
    %v423 = vor.u32 %v421, %v422
    %v424 = vshll.u32 920167782, %v409
    %v425 = vshrl.u32 1326507024, %v410
    %v426 = vor.u32 %v424, %v425
    %vm427 = vcmp.lt.s32.totalorder %v408, 1
    %vm428 = vcmp.lt.s32.totalorder %v408, 2
    %vm429 = vcmp.lt.s32.totalorder %v408, 3
    %vm430 = vcmp.lt.s32.totalorder %v408, 4
    %v431 = vsel %vm427, %v411, %v414
    %v432 = vsel %vm430, %v420, 2102212464
    %v433 = vsel %vm429, %v417, %v432
    %v434 = vsel %vm428, %v431, %v433
    %v435 = vsel %vm427, %v414, %v417
    %v436 = vsel %vm430, %v423, 920167782
    %v437 = vsel %vm429, %v420, %v436
    %v438 = vsel %vm428, %v435, %v437
    %v439 = vsel %vm427, %v417, %v420
    %v440 = vsel %vm430, %v426, 1326507024
    %v441 = vsel %vm429, %v423, %v440
    %v442 = vsel %vm428, %v439, %v441
    %v443 = vshll.u32 %v403, 8
    %v444 = vmul.u32.u64.compose %v443, %v442
    %v445 = vextract.low.u32 %v444
    %v446 = vextract.high.u32 %v444
    %v447 = vmul.u32.u64.compose %v443, %v438
    %v448 = vextract.low.u32 %v447
    %v449 = vextract.high.u32 %v447
    %v450 = vmul.u32 %v443, %v434
    %v451 = vadd.s32 %v446, %v448
    %vm452 = vc.u32 %v446, %v448
    %v453 = vadd.s32 %v449, 1
    %v454 = vsel %vm452, %v453, %v449
    %v455 = vadd.s32 %v450, %v454
    %v456 = vadd.s32 %v455, 536870912
    %v457 = vshrl.u32 %v456, 30
    %v458 = vshll.u32 %v457, 30
    %v459 = vsub.s32 %v455, %v458
    %vm460 = vcmp.lt.s32.totalorder %v459, 0
    %v461 = vsub.s32 0, %v459
    %v462 = vsel %vm460, %v461, %v459
    %v463 = vclz %v462
    %v464 = vsub.s32 %v463, 2
    %vm465 = vcmp.gt.s32.totalorder 0, %v464
    %v466 = vsel %vm465, 0, %v464
    %v467 = vsub.s32 32, %v466
    %v468 = vshll.u32 %v459, %v466
    %v469 = vshrl.u32 %v451, %v467
    %v470 = vor.u32 %v468, %v469
    %v471 = vsub.s32 4294967266, %v466
    %v472 = vadd.s32 %v471, 127
    %v473 = vshll.u32 %v472, 23
    %v474 = vor.u32 4788187, %v473
    %v475 = vand.u32 2147483647, %v474
    %v477 = vcvt.s32.f32 %v470
    %v478 = vmul.f32 %v477, %v475
    %v479 = vxor.u32 %v478, 2147483648
    %v480 = vsel %vm397, %v479, %v478
    %v481 = vsub.s32 4, %v457
    %v482 = vsel %vm397, %v481, %v457
    %v483 = vsel %vm396, %v83, %v480
    %v484 = vsel %vm396, 0, %v482
    %v485 = vcosq.f32.pop %v483
    %v486 = vsinq.f32.pop %v483
    %vm487 = vweird.f32 %v83
    %v488 = vand.u32 %v484, 3
    %vm489 = vcmp.lt.s32.totalorder %v488, 2
    %vm490 = vcmp.eq.s32.totalorder %v488, 0
    %v491 = vxor.u32 %v486, 2147483648
    %v492 = vsel %vm490, %v485, %v491
    %vm493 = vcmp.eq.s32.totalorder %v488, 2
    %v494 = vxor.u32 %v485, 2147483648
    %v495 = vsel %vm493, %v494, %v486
    %v496 = vsel %vm489, %v492, %v495
    %v497 = vsel %vm487, nan, %v496
    %v498 = vmul.f32 %v187, 2.0
    %v499 = vmul.f32 %v291, 2.0
    %v500 = vmul.f32 %v498, %v394
    %v501 = vmul.f32 %v499, %v497
    %v502 = vmul.f32 %v498, %v187
    %v503 = vmul.f32 %v499, %v291
    %v504 = vsub.f32 1.0, %v502
    %v505 = vsub.f32 1.0, %v503
    %v506 = vmul.f32 %v72, %v500
    %v507 = vmul.f32 %v73, %v501
    %v508 = vmul.f32 %v502, %v500
    %v509 = vmul.f32 %v503, %v501
    %v510 = vmul.f32 %v500, %v504
    %v511 = vmul.f32 %v501, %v505
    %v512 = vsub.f32 %v508, %v510
    %v513 = vsub.f32 %v509, %v511
    %v514 = vsub.f32 %v500, %v512
    %v515 = vsub.f32 %v501, %v513
    %v516 = vmul.f32 %v502, %v504
    %v517 = vmul.f32 %v503, %v505
    %v518 = vmul.f32 %v500, %v500
    %v519 = vmul.f32 %v501, %v501
    %v520 = vadd.f32 %v516, %v518
    %v521 = vadd.f32 %v517, %v519
    %v522 = vsub.f32 %v504, %v520
    %v523 = vsub.f32 %v505, %v521
    %v524 = vmul.f32 %v72, %v514
    %v525 = vmul.f32 %v73, %v515
    %v526 = vmul.f32 %v502, %v514
    %v527 = vmul.f32 %v503, %v515
    %v528 = vmul.f32 %v500, %v522
    %v529 = vmul.f32 %v501, %v523
    %v530 = vsub.f32 %v526, %v528
    %v531 = vsub.f32 %v527, %v529
    %v532 = vsub.f32 %v514, %v530
    %v533 = vsub.f32 %v515, %v531
    %v534 = vmul.f32 %v502, %v522
    %v535 = vmul.f32 %v503, %v523
    %v536 = vmul.f32 %v500, %v514
    %v537 = vmul.f32 %v501, %v515
    %v538 = vadd.f32 %v534, %v536
    %v539 = vadd.f32 %v535, %v537
    %v540 = vsub.f32 %v522, %v538
    %v541 = vsub.f32 %v523, %v539
    %v542 = vmul.f32 %v72, %v532
    %v543 = vmul.f32 %v73, %v533
    %v544 = vmul.f32 %v502, %v532
    %v545 = vmul.f32 %v503, %v533
    %v546 = vmul.f32 %v500, %v540
    %v547 = vmul.f32 %v501, %v541
    %v548 = vsub.f32 %v544, %v546
    %v549 = vsub.f32 %v545, %v547
    %v550 = vsub.f32 %v532, %v548
    %v551 = vsub.f32 %v533, %v549
    %v552 = vmul.f32 %v502, %v540
    %v553 = vmul.f32 %v503, %v541
    %v554 = vmul.f32 %v500, %v532
    %v555 = vmul.f32 %v501, %v533
    %v556 = vadd.f32 %v552, %v554
    %v557 = vadd.f32 %v553, %v555
    %v558 = vsub.f32 %v540, %v556
    %v559 = vsub.f32 %v541, %v557
    %v560 = vmul.f32 %v72, %v550
    %v561 = vmul.f32 %v73, %v551
    %v562 = vmul.f32 %v502, %v550
    %v563 = vmul.f32 %v503, %v551
    %v564 = vmul.f32 %v500, %v558
    %v565 = vmul.f32 %v501, %v559
    %v566 = vsub.f32 %v562, %v564
    %v567 = vsub.f32 %v563, %v565
    %v568 = vsub.f32 %v550, %v566
    %v569 = vsub.f32 %v551, %v567
    %v570 = vmul.f32 %v502, %v558
    %v571 = vmul.f32 %v503, %v559
    %v572 = vmul.f32 %v500, %v550
    %v573 = vmul.f32 %v501, %v551
    %v574 = vadd.f32 %v570, %v572
    %v575 = vadd.f32 %v571, %v573
    %v576 = vsub.f32 %v558, %v574
    %v577 = vsub.f32 %v559, %v575
    %v578 = vmul.f32 %v72, %v568
    %v579 = vmul.f32 %v73, %v569
    %v580 = vmul.f32 %v502, %v568
    %v581 = vmul.f32 %v503, %v569
    %v582 = vmul.f32 %v500, %v576
    %v583 = vmul.f32 %v501, %v577
    %v584 = vsub.f32 %v580, %v582
    %v585 = vsub.f32 %v581, %v583
    %v586 = vsub.f32 %v568, %v584
    %v587 = vsub.f32 %v569, %v585
    %v588 = vmul.f32 %v502, %v576
    %v589 = vmul.f32 %v503, %v577
    %v590 = vmul.f32 %v500, %v568
    %v591 = vmul.f32 %v501, %v569
    %v592 = vadd.f32 %v588, %v590
    %v593 = vadd.f32 %v589, %v591
    %v594 = vsub.f32 %v576, %v592
    %v595 = vsub.f32 %v577, %v593
    %v596 = vmul.f32 %v72, %v586
    %v597 = vmul.f32 %v73, %v587
    %v598 = vmul.f32 %v502, %v586
    %v599 = vmul.f32 %v503, %v587
    %v600 = vmul.f32 %v500, %v594
    %v601 = vmul.f32 %v501, %v595
    %v602 = vsub.f32 %v598, %v600
    %v603 = vsub.f32 %v599, %v601
    %v604 = vsub.f32 %v586, %v602
    %v605 = vsub.f32 %v587, %v603
    %v606 = vmul.f32 %v502, %v594
    %v607 = vmul.f32 %v503, %v595
    %v608 = vmul.f32 %v500, %v586
    %v609 = vmul.f32 %v501, %v587
    %v610 = vadd.f32 %v606, %v608
    %v611 = vadd.f32 %v607, %v609
    %v612 = vsub.f32 %v594, %v610
    %v613 = vsub.f32 %v595, %v611
    %v614 = vmul.f32 %v72, %v604
    %v615 = vmul.f32 %v73, %v605
    %v616 = vmul.f32 %v502, %v604
    %v617 = vmul.f32 %v503, %v605
    %v618 = vmul.f32 %v500, %v612
    %v619 = vmul.f32 %v501, %v613
    %v620 = vsub.f32 %v616, %v618
    %v621 = vsub.f32 %v617, %v619
    %v622 = vsub.f32 %v604, %v620
    %v623 = vsub.f32 %v605, %v621
    %v624 = vmul.f32 %v72, %v622
    %v625 = vmul.f32 %v73, %v623
    %v628 = vrot.slane %v524, 7
    %v629 = vrot.slane %v525, 7
    %v634 = vrot.slane %v542, 6
    %v635 = vrot.slane %v543, 6
    %v640 = vrot.slane %v560, 5
    %v641 = vrot.slane %v561, 5
    %v646 = vrot.slane %v578, 4
    %v647 = vrot.slane %v579, 4
    %v652 = vrot.slane %v596, 3
    %v653 = vrot.slane %v597, 3
    %v658 = vrot.slane %v614, 2
    %v659 = vrot.slane %v615, 2
    %v664 = vrot.slane %v624, 1
    %v665 = vrot.slane %v625, 1
    %vm668 = vcmask 1040384
    %v669 = vsel %vm668, %v506, %v628
    %v670 = vsel %vm668, %v507, %v629
    %vm671 = vcmask 1041408
    %v672 = vsel %vm671, %v669, %v634
    %v673 = vsel %vm671, %v670, %v635
    %vm674 = vcmask 1042432
    %v675 = vsel %vm674, %v672, %v640
    %v676 = vsel %vm674, %v673, %v641
    %vm677 = vcmask 1043456
    %v678 = vsel %vm677, %v675, %v646
    %v679 = vsel %vm677, %v676, %v647
    %vm680 = vcmask 1044480
    %v681 = vsel %vm680, %v678, %v652
    %v682 = vsel %vm680, %v679, %v653
    %vm683 = vcmask 1045504
    %v684 = vsel %vm683, %v681, %v658
    %v685 = vsel %vm683, %v682, %v659
    %vm686 = vcmask 1046528
    %v687 = vsel %vm686, %v684, %v664
    %v688 = vsel %vm686, %v685, %v665
    %689 = vst [vmem:[#allocation2] sm:$0xff] %v687
    %vm690 = vcmask 588800
    %691 = vst.msk [vmem:[#allocation2 + $0x8] sm:$0xff] %vm690, %v688
    // Predicated region
    $region10: #{tpu_custom_call.1} parent=1 // pred_check
      _
    $region11: #{tpu_custom_call.1} parent=1 // pred_check_branch
      %693 = sbr.rel (0) target = $region13
    $region12: #{tpu_custom_call.1} parent=1 // pred_region
      %s695 = ssub.s32 256, 256
      %696 = vsyncadd [#allocation3], %s695
      %s698 = sshll.u32 [#allocation2], 4
      %s699 = int_to_ptr.vmem [resolvable:$true] %s698
      %701 = dma.vmem_to_hbm [thread:$0]  %s699, 256, %s2, [#allocation3]
    $region13: #{tpu_custom_call.1} parent=1 // pred_fallthru
      _
    // Predicated region
    $region14: #{tpu_custom_call.1} parent=1 // pred_check
      _
    $region15: #{tpu_custom_call.1} parent=1 // pred_check_branch
      %703 = sbr.rel (0) target = $region17
    $region16: #{tpu_custom_call.1} parent=1 // pred_region
      %704 = dma.done [#allocation3], 256
    $region17: #{tpu_custom_call.1} parent=1 // pred_fallthru
      _
    %705 = vsyncpa [#allocation3], 1

</llo_original>
